<compile_context>
chip_gen: v5e
topology: v5e:2x2
jax: 0.10.0
libtpu: 0.0.40
codegen_flags: <defaults>
</compile_context>

<pallas_src>
import functools

import jax
import jax.numpy as jnp
from jax.experimental import pallas as pl
from jax.experimental.pallas import tpu as pltpu


def _input_layer_kernel(sigv_ref, z_ref, p_ref, j_ref, out_ref, *, length):
    """Fused expectation/var/mu/sigma^2 + feature assembly for one row tile."""
    L = length
    tk = p_ref.shape[0]
    M = j_ref.shape[-1]

    p = p_ref[...]                     # (tk, L)
    J = j_ref[...]                     # (tk, M)
    z = z_ref[...]                     # (tk, 1)
    sig_v = sigv_ref[0]                # scalar noise variance (SMEM)

    sym0 = float(1 - L)                # symbols[l] = (1 - L) + 2*l

    # Broadcast constellation built in-kernel from an iota (no constant DMA).
    lane = jax.lax.broadcasted_iota(jnp.int32, (tk, L), 1).astype(jnp.float32)
    sym_b = sym0 + 2.0 * lane          # (tk, L)

    # expectation = p_pre @ symbols ; second = p_pre @ symbols^2
    # Full-width VALU multiply + single lane reduce (XLU) — no MXU.
    expectation = jnp.sum(p * sym_b, axis=-1, keepdims=True)          # (tk, 1)
    second = jnp.sum(p * (sym_b * sym_b), axis=-1, keepdims=True)     # (tk, 1)
    var = second - expectation * expectation

    j_head = J[:, :M - 1]              # (tk, M-1)
    j_last = J[:, M - 1:M]             # (tk, 1)
    row_sum = jnp.sum(j_head, axis=-1, keepdims=True)
    row_sum_sq = jnp.sum(j_head * j_head, axis=-1, keepdims=True)

    # mu_i      = e_i * sum_j J[i, :-1]    - J[i, -1]   * e_i
    # sigma^2_i = v_i * sum_j J[i, :-1]^2  - J[i, -1]^2 * v_i + sigma_square_v
    mu = expectation * row_sum - j_last * expectation
    sigma_sq = var * row_sum_sq - (j_last * j_last) * var + sig_v

    s_add = sym_b + sym0               # symbols + symbols[0], broadcast over rows
    s_minor = sym_b - sym0             # symbols - symbols[0]

    # One assembled lane-dense store: [z | mu | sigma^2 | s_add | s_minor | J].
    out_ref[...] = jnp.concatenate([z, mu, sigma_sq, s_add, s_minor, J], axis=-1)


def _round_up(x, m):
    return (x + m - 1) // m * m


def _row_tile(K):
    """Fixed 8-aligned row tile.

    Small K -> single step covering everything.  Large K -> tiles sized so
    each step moves multiple MiB (amortizes the ~0.35 us per-step overhead)
    while keeping the double-buffered footprint well inside v7x's 64 MiB VMEM,
    and guaranteeing >= 2 grid steps so both v7x TensorCores get work.
    """
    if K <= 1024:
        return _round_up(K, 8)
    cap = 32768                                   # ~4.5 MiB/step at F=20, x2 buffers
    return min(cap, _round_up(pl.cdiv(K, 2), 8))  # >= 2 steps for large K


def input_layer_forward(z_i, J_i, p_pre, *, length, sigma_square_v):
    K, L = p_pre.shape
    M = J_i.shape[-1]
    assert z_i.shape[0] == K and J_i.shape[0] == K and L == length
    F = 3 + 2 * L + M                  # features per row

    z2d = z_i.reshape(K, 1).astype(jnp.float32)
    J_i = J_i.astype(jnp.float32)
    p_pre = p_pre.astype(jnp.float32)
    # SMEM scalar: avoids a Mosaic recompile when the noise variance changes.
    sig_arr = jnp.asarray([sigma_square_v], dtype=jnp.float32)

    tk = _row_tile(K)
    K_pad = _round_up(K, tk)
    if K_pad != K:
        # Ragged last tile: zero-pad rows (row-local math; padded rows are
        # computed but sliced off below, never read back as garbage).
        pad = K_pad - K
        z2d = jnp.pad(z2d, ((0, pad), (0, 0)))
        J_i = jnp.pad(J_i, ((0, pad), (0, 0)))
        p_pre = jnp.pad(p_pre, ((0, pad), (0, 0)))
    grid = (K_pad // tk,)

    # Explicit VMEM budget from the double-buffered tile footprint (+headroom),
    # capped under the v7x 32 MiB scoped default.
    bytes_per_row = (1 + L + M + F) * 4
    vmem_limit = int(min(32 << 20, max(8 << 20, 6 * tk * bytes_per_row)))

    kernel = functools.partial(_input_layer_kernel, length=length)

    out = pl.pallas_call(
        kernel,
        grid=grid,
        in_specs=[
            pl.BlockSpec(memory_space=pltpu.MemorySpace.SMEM),   # sigma_square_v
            pl.BlockSpec((tk, 1), lambda i: (i, 0)),             # z_i (as column)
            pl.BlockSpec((tk, L), lambda i: (i, 0)),             # p_pre
            pl.BlockSpec((tk, M), lambda i: (i, 0)),             # J_i
        ],
        out_specs=pl.BlockSpec((tk, F), lambda i: (i, 0)),
        out_shape=jax.ShapeDtypeStruct((K_pad, F), jnp.float32),
        compiler_params=pltpu.CompilerParams(
            dimension_semantics=("parallel",),
            vmem_limit_bytes=vmem_limit),
    )(sig_arr, z2d, p_pre, J_i)
    return out[:K] if K_pad != K else out


def _reference_forward(z_i, J_i, p_pre, *, length, sigma_square_v):
    """Pure-JAX reference mirroring the PyTorch math."""
    symbols = jnp.linspace(1 - length, length - 1, length, dtype=jnp.float32)
    expectation = p_pre @ symbols
    var = p_pre @ (symbols ** 2) - expectation ** 2
    mu = jnp.einsum('ij,i->i', J_i[:, :-1], expectation) - J_i[:, -1] * expectation
    sigma_square = (jnp.einsum('ij,i->i', J_i[:, :-1] ** 2, var)
                    - (J_i[:, -1] ** 2) * var + sigma_square_v)
    K = z_i.shape[0]
    s_add = jnp.tile((symbols + symbols[0])[None, :], (K, 1))
    s_minor = jnp.tile((symbols - symbols[0])[None, :], (K, 1))
    return jnp.concatenate(
        [z_i.reshape(K, 1), mu.reshape(K, 1), sigma_square.reshape(K, 1),
         s_add, s_minor, J_i], axis=-1)


if __name__ == "__main__":
    length = 4            # constellation size L
    sigma_square_v = 0.1
    K = 8                 # number of transmit symbols
    M = K + 1             # J_i has an extra (last) column

    key = jax.random.PRNGKey(0)
    k1, k2, k3 = jax.random.split(key, 3)
    z_i = jax.random.normal(k1, (K,), dtype=jnp.float32)
    J_i = jax.random.normal(k2, (K, M), dtype=jnp.float32)
    p_pre = jax.nn.softmax(jax.random.normal(k3, (K, length), dtype=jnp.float32),
                           axis=-1)

    out = input_layer_forward(z_i, J_i, p_pre,
                              length=length, sigma_square_v=sigma_square_v)
    out = jax.block_until_ready(out)

    ref = _reference_forward(z_i, J_i, p_pre,
                             length=length, sigma_square_v=sigma_square_v)
    assert out.shape == (K, 3 + 2 * length + M), out.shape
    assert jnp.allclose(out, ref, atol=1e-5, rtol=1e-5), "mismatch vs reference"

    print("KERNEL_OK")
</pallas_src>

<mosaic_0001>
module attributes {stable_mosaic.version = 11 : i64} {
  func.func @_input_layer_kernel(%arg0: i32, %arg1: memref<1xf32, #tpu.memory_space<smem>>, %arg2: memref<8x1xf32, #tpu.memory_space<vmem>>, %arg3: memref<8x4xf32, #tpu.memory_space<vmem>>, %arg4: memref<8x9xf32, #tpu.memory_space<vmem>>, %arg5: memref<8x20xf32, #tpu.memory_space<vmem>>) attributes {dimension_semantics = [#tpu.dimension_semantics<parallel>], iteration_bounds = array<i64: 1>, scalar_prefetch = 0 : i64, scratch_operands = 0 : i64, tpu.core_type = #tpu.core_type<tc>, window_params = [{transform_indices = @transform_0, window_bounds = array<i64: 1>}, {transform_indices = @transform_1, window_bounds = array<i64: 8, 1>}, {transform_indices = @transform_2, window_bounds = array<i64: 8, 4>}, {transform_indices = @transform_3, window_bounds = array<i64: 8, 9>}, {transform_indices = @transform_4, window_bounds = array<i64: 8, 20>}]} {
    %c0 = arith.constant 0 : index
    %c0_0 = arith.constant 0 : index
    %0 = vector.load %arg3[%c0, %c0_0] : memref<8x4xf32, #tpu.memory_space<vmem>>, vector<8x4xf32>
    %c0_1 = arith.constant 0 : index
    %c0_2 = arith.constant 0 : index
    %1 = vector.load %arg4[%c0_1, %c0_2] : memref<8x9xf32, #tpu.memory_space<vmem>>, vector<8x9xf32>
    %c0_3 = arith.constant 0 : index
    %c0_4 = arith.constant 0 : index
    %2 = vector.load %arg2[%c0_3, %c0_4] : memref<8x1xf32, #tpu.memory_space<vmem>>, vector<8x1xf32>
    %c0_5 = arith.constant 0 : index
    %3 = memref.load %arg1[%c0_5] : memref<1xf32, #tpu.memory_space<smem>>
    %4 = tpu.iota {dimensions = array<i32: 1>} : vector<8x4xi32>
    %5 = arith.sitofp %4 : vector<8x4xi32> to vector<8x4xf32>
    %cst = arith.constant 2.000000e+00 : f32
    %6 = vector.broadcast %cst : f32 to vector<8x4xf32>
    %7 = arith.mulf %6, %5 : vector<8x4xf32>
    %cst_6 = arith.constant -3.000000e+00 : f32
    %8 = vector.broadcast %cst_6 : f32 to vector<8x4xf32>
    %9 = arith.addf %8, %7 : vector<8x4xf32>
    %10 = arith.mulf %0, %9 : vector<8x4xf32>
    %cst_7 = arith.constant dense<0.000000e+00> : vector<8xf32>
    %11 = vector.multi_reduction <add>, %10, %cst_7 [1] : vector<8x4xf32> to vector<8xf32>
    %12 = vector.shape_cast %11 : vector<8xf32> to vector<8x1xf32>
    %13 = arith.mulf %9, %9 : vector<8x4xf32>
    %14 = arith.mulf %0, %13 : vector<8x4xf32>
    %cst_8 = arith.constant dense<0.000000e+00> : vector<8xf32>
    %15 = vector.multi_reduction <add>, %14, %cst_8 [1] : vector<8x4xf32> to vector<8xf32>
    %16 = vector.shape_cast %15 : vector<8xf32> to vector<8x1xf32>
    %17 = arith.mulf %12, %12 : vector<8x1xf32>
    %18 = arith.subf %16, %17 : vector<8x1xf32>
    %19 = vector.extract_strided_slice %1 {offsets = [0, 0], sizes = [8, 8], strides = [1, 1]} : vector<8x9xf32> to vector<8x8xf32>
    %20 = vector.extract_strided_slice %1 {offsets = [0, 8], sizes = [8, 1], strides = [1, 1]} : vector<8x9xf32> to vector<8x1xf32>
    %cst_9 = arith.constant dense<0.000000e+00> : vector<8xf32>
    %21 = vector.multi_reduction <add>, %19, %cst_9 [1] : vector<8x8xf32> to vector<8xf32>
    %22 = vector.shape_cast %21 : vector<8xf32> to vector<8x1xf32>
    %23 = arith.mulf %19, %19 : vector<8x8xf32>
    %cst_10 = arith.constant dense<0.000000e+00> : vector<8xf32>
    %24 = vector.multi_reduction <add>, %23, %cst_10 [1] : vector<8x8xf32> to vector<8xf32>
    %25 = vector.shape_cast %24 : vector<8xf32> to vector<8x1xf32>
    %26 = arith.mulf %12, %22 : vector<8x1xf32>
    %27 = arith.mulf %20, %12 : vector<8x1xf32>
    %28 = arith.subf %26, %27 : vector<8x1xf32>
    %29 = arith.mulf %18, %25 : vector<8x1xf32>
    %30 = arith.mulf %20, %20 : vector<8x1xf32>
    %31 = arith.mulf %30, %18 : vector<8x1xf32>
    %32 = arith.subf %29, %31 : vector<8x1xf32>
    %33 = vector.broadcast %3 : f32 to vector<8x1xf32>
    %34 = arith.addf %32, %33 : vector<8x1xf32>
    %cst_11 = arith.constant -3.000000e+00 : f32
    %35 = vector.broadcast %cst_11 : f32 to vector<8x4xf32>
    %36 = arith.addf %9, %35 : vector<8x4xf32>
    %cst_12 = arith.constant -3.000000e+00 : f32
    %37 = vector.broadcast %cst_12 : f32 to vector<8x4xf32>
    %38 = arith.subf %9, %37 : vector<8x4xf32>
    %39 = tpu.concatenate %2, %28, %34, %36, %38, %1 in 1 : vector<8x1xf32>, vector<8x1xf32>, vector<8x1xf32>, vector<8x4xf32>, vector<8x4xf32>, vector<8x9xf32> -> vector<8x20xf32>
    %c0_13 = arith.constant 0 : index
    %c0_14 = arith.constant 0 : index
    %40 = vector.load %arg5[%c0_13, %c0_14] : memref<8x20xf32, #tpu.memory_space<vmem>>, vector<8x20xf32>
    tpu.vector_store %arg5[%c0_13, %c0_14], %39 {strides = array<i32>} : memref<8x20xf32, #tpu.memory_space<vmem>>, vector<8x20xf32>,
    return
  }
  func.func @transform_0(%arg0: i32) -> i32 {
    %c0_i32 = arith.constant 0 : i32
    %c0_i32_0 = arith.constant 0 : i32
    return %c0_i32 : i32
  }
  func.func @transform_1(%arg0: i32) -> (i32, i32) {
    %c0_i32 = arith.constant 0 : i32
    %c0_i32_0 = arith.constant 0 : i32
    return %arg0, %c0_i32 : i32, i32
  }
  func.func @transform_2(%arg0: i32) -> (i32, i32) {
    %c0_i32 = arith.constant 0 : i32
    %c0_i32_0 = arith.constant 0 : i32
    return %arg0, %c0_i32 : i32, i32
  }
  func.func @transform_3(%arg0: i32) -> (i32, i32) {
    %c0_i32 = arith.constant 0 : i32
    %c0_i32_0 = arith.constant 0 : i32
    return %arg0, %c0_i32 : i32, i32
  }
  func.func @transform_4(%arg0: i32) -> (i32, i32) {
    %c0_i32 = arith.constant 0 : i32
    %c0_i32_0 = arith.constant 0 : i32
    return %arg0, %c0_i32 : i32, i32
  }
}

</mosaic_0001>

<llo_original>
// kernel: tpu_custom_call.1
$region0: #{tpu_custom_call.1}
  #allocation0 [shape = 'u32[]', space=smem, size = 0x4, offset = 0x4, fixed_abs, tag = 'smem constant byte address 0x4 - core index']
  #allocation1 [shape = 'u32[72,128]{1,0:T(1,128)}', space=vmem, size = 0x9000, scoped, tag = 'internal scratch']
  #allocation2 [shape = 'f32[1]{0:T(128)S(6)}', space=smem, size = 0x200, scoped, tag = 'scoped memory for tpu_custom_call.1']
  %s0 = inlined_call_operand.<no memory space> [shape: f32[1], index: 0, kind: input, shape index: {}]
  %s1 = inlined_call_operand.vmem [shape: f32[8,1], index: 1, kind: input, shape index: {}]
  %s2 = inlined_call_operand.vmem [shape: f32[8,4], index: 2, kind: input, shape index: {}]
  %s3 = inlined_call_operand.vmem [shape: f32[8,9], index: 3, kind: input, shape index: {}]
  %s4 = inlined_call_operand.hbm [shape: f32[8,20], index: 4, kind: output, shape index: {}]
  %s5 = sld [smem:[#allocation0]]
  $region26: #{tpu_custom_call.1} parent=0
    _
  %s7 = ssub.s32 1, %s5
  %s8 = scalar_select 0, %s7, %s5
  %9 = sst [smem:[#allocation2]] %s0
  $region1: #{tpu_custom_call.1} parent=0
    #allocation3 [shape = 'u8[4096]{0}', space=vmem, size = 0x1000, scoped, tag = 'output window, operand 0, single buffered']
    #allocation4 [shape = 's32[1]{0}', space=sflag, size = 0x4, scoped, tag = 'scoped memory for tpu_custom_call.1']
    %10 = vsyncpa [#allocation4], 0
    // Predicated region
    $region2: #{tpu_custom_call.1} parent=1 // pred_check
      _
    $region3: #{tpu_custom_call.1} parent=1 // pred_check_branch
      %12 = sbr.rel (0) target = $region5
    $region4: #{tpu_custom_call.1} parent=1 // pred_region
      _
    $region5: #{tpu_custom_call.1} parent=1 // pred_fallthru
      _
    // Predicated region
    $region6: #{tpu_custom_call.1} parent=1 // pred_check
      _
    $region7: #{tpu_custom_call.1} parent=1 // pred_check_branch
      %14 = sbr.rel (0) target = $region9
    $region8: #{tpu_custom_call.1} parent=1 // pred_region
      _
    $region9: #{tpu_custom_call.1} parent=1 // pred_fallthru
      _
    // Predicated region
    $region10: #{tpu_custom_call.1} parent=1 // pred_check
      _
    $region11: #{tpu_custom_call.1} parent=1 // pred_check_branch
      %16 = sbr.rel (0) target = $region13
    $region12: #{tpu_custom_call.1} parent=1 // pred_region
      _
    $region13: #{tpu_custom_call.1} parent=1 // pred_fallthru
      _
    // Predicated region
    $region14: #{tpu_custom_call.1} parent=1 // pred_check
      _
    $region15: #{tpu_custom_call.1} parent=1 // pred_check_branch
      %18 = sbr.rel (0) target = $region17
    $region16: #{tpu_custom_call.1} parent=1 // pred_region
      _
    $region17: #{tpu_custom_call.1} parent=1 // pred_fallthru
      _
    %v19 = vld [vmem:[%s2] sm:$0xff]
    %v20 = vld [vmem:[%s3] sm:$0xff]
    %v21 = vld [vmem:[%s1] sm:$0xff]
    %s22 = sld [smem:[#allocation2]]
    %v23 = vlaneseq
    %v24 = vand.u32 %v23, 127
    %v25 = vcvt.s32.f32 %v24
    %v26 = vmul.f32 %v25, 2.0
    %v27 = vadd.f32 %v26, -3.0
    %v28 = vmul.f32 %v19, %v27
    %vm29 = vcmask 31744
    %v30 = vsel %vm29, %v28, 0.0
    %31 = vadd.xlane.f32.xlu0 %v30
    %v32 = vpop.xlane.xlu0 %31
    %v33 = vmul.f32 %v27, %v27
    %v34 = vmul.f32 %v19, %v33
    %v35 = vsel %vm29, %v34, 0.0
    %36 = vadd.xlane.f32.xlu0 %v35
    %v37 = vpop.xlane.xlu0 %36
    %v38 = vmul.f32 %v32, %v32
    %v39 = vsub.f32 %v37, %v38
    %vm40 = vcmask 64512
    %v41 = vsel %vm40, %v20, 0.0
    %42 = vadd.xlane.f32.xlu0 %v41
    %v43 = vpop.xlane.xlu0 %42
    %v44 = vmul.f32 %v20, %v20
    %v45 = vsel %vm40, %v44, 0.0
    %46 = vadd.xlane.f32.xlu0 %v45
    %v47 = vpop.xlane.xlu0 %46
    %v48 = vmul.f32 %v32, %v43
    %v49 = vmul.f32 %v20, %v32
    %v50 = vsub.f32 %v48, %v49
    %v51 = vmul.f32 %v39, %v47
    %v52 = vmul.f32 %v44, %v39
    %v53 = vsub.f32 %v51, %v52
    %v54 = vstv %s22
    %v55 = vadd.f32 %v53, %v54
    %v56 = vadd.f32 %v27, -3.0
    %v57 = vsub.f32 %v27, -3.0
    %59 = vrot.lane.b32.xlu0 %v50, 121
    %v60 = vpop.permute.xlu0 %59
    %63 = vrot.lane.b32.xlu0 %v55, 122
    %v64 = vpop.permute.xlu0 %63
    %67 = vrot.lane.b32.xlu0 %v56, 3
    %v68 = vpop.permute.xlu0 %67
    %71 = vrot.lane.b32.xlu0 %v57, 7
    %v72 = vpop.permute.xlu0 %71
    %75 = vrot.lane.b32.xlu0 %v20, 11
    %v76 = vpop.permute.xlu0 %75
    %vm78 = vcmask 7168
    %v79 = vsel %vm78, %v21, %v60
    %vm80 = vcmask 15360
    %v81 = vsel %vm80, %v79, %v64
    %vm82 = vcmask 23552
    %v83 = vsel %vm82, %v81, %v68
    %vm84 = vcmask 56320
    %v85 = vsel %vm84, %v83, %v72
    %vm86 = vcmask 89088
    %v87 = vsel %vm86, %v85, %v76
    %vm88 = vcmask 162816
    %89 = vst.msk [vmem:[#allocation3] sm:$0xff] %vm88, %v87
    // Predicated region
    $region18: #{tpu_custom_call.1} parent=1 // pred_check
      _
    $region19: #{tpu_custom_call.1} parent=1 // pred_check_branch
      %91 = sbr.rel (0) target = $region21
    $region20: #{tpu_custom_call.1} parent=1 // pred_region
      %93 = vsyncadd [#allocation4], 0
      %s95 = sshll.u32 [#allocation3], 4
      %s96 = int_to_ptr.vmem [resolvable:$true] %s95
      %s97 = sshll.u32 %s4, 4
      %s98 = int_to_ptr.hbm [resolvable:$true] %s97
      %100 = dma.vmem_to_hbm [thread:$0]  %s96, 128, %s98, [#allocation4]
    $region21: #{tpu_custom_call.1} parent=1 // pred_fallthru
      _
    // Predicated region
    $region22: #{tpu_custom_call.1} parent=1 // pred_check
      _
    $region23: #{tpu_custom_call.1} parent=1 // pred_check_branch
      %102 = sbr.rel (0) target = $region25
    $region24: #{tpu_custom_call.1} parent=1 // pred_region
      %104 = dma.done [#allocation4], 128
    $region25: #{tpu_custom_call.1} parent=1 // pred_fallthru
      _
    %105 = vsyncpa [#allocation4], 1

</llo_original>
